<compile_context>
chip_gen: v6e
topology: v6e:2x2x1
jax: 0.10.0
libtpu: 0.0.40
codegen_flags: <defaults>
</compile_context>

<pallas_src>
import math
import functools

import jax
import jax.numpy as jnp
from jax.experimental import pallas as pl
from jax.experimental.pallas import tpu as pltpu

LANE = 128
SUBLANE = 8


def _round_up(v, mult):
    return ((v + mult - 1) // mult) * mult


# ---------------------------------------------------------------------------
# Kernel: everything in the lane-dense NP-wide slot space.
# ---------------------------------------------------------------------------
def make_lai_kernel(m):
    def kernel(x_ref, w_in_ref, w_stack_ref, b_stack_ref, out_ref):
        f32 = jnp.float32

        def dot(a, w):
            return jnp.dot(a, w, preferred_element_type=f32)

        w = lambda k: w_stack_ref[k]   # (NP, NP), static index
        b = lambda k: b_stack_ref[k]   # (1, NP),  static index

        x = x_ref[...].astype(f32)

        # ---- fused input transforms: slot i of xcat = x @ W_in_i.T + b_i ----
        xcat = dot(x, w_in_ref[...]) + b(0)

        # ---- forward message pass (slot-embedded accumulator) ----
        k = 0
        acc_f = dot(xcat, w(k)) + b(1)                       # slot 0 = fwd[0]
        k += 1
        for i in range(1, m):
            acc_f = acc_f + dot(acc_f, w(k)) + dot(xcat, w(k + 1)) + b(1 + i)
            k += 2                                           # slot i = fwd[i]

        # ---- backward message pass (slot-embedded accumulator) ----
        acc_b = dot(xcat, w(k)) + b(m + 1)                   # slot m-1 = bwd[m-1]
        k += 1
        for j in range(1, m):
            acc_b = acc_b + dot(acc_b, w(k)) + dot(xcat, w(k + 1)) + b(m + 1 + j)
            k += 2                                           # slot m-1-j = bwd[m-1-j]

        # ---- fused output dual-linears (block-diagonal weights) ----
        out = dot(acc_f, w(k)) + dot(acc_b, w(k + 1)) + b(2 * m + 1)
        out_ref[...] = out.astype(out_ref.dtype)             # one lane-dense store

    return kernel


# ---------------------------------------------------------------------------
# Deterministic parameter init (PyTorch layout/order, unchanged).
# ---------------------------------------------------------------------------
def _uniform(key, shape, bound):
    return jax.random.uniform(key, shape, jnp.float32, -bound, bound)


def _linear(key, out_f, in_f):
    kw, kb = jax.random.split(key)
    bound = 1.0 / math.sqrt(in_f)
    return [_uniform(kw, (out_f, in_f), bound), _uniform(kb, (1, out_f), bound)]


def _linear_dual(key, in1, in2, out_f):
    k1, k2, kb = jax.random.split(key, 3)
    w1 = _uniform(k1, (out_f, in1), 1.0 / math.sqrt(in1))
    w2 = _uniform(k2, (out_f, in2), 1.0 / math.sqrt(in2))
    b = _uniform(kb, (1, out_f), 1.0 / math.sqrt(min(in1, in2)))
    return [w1, w2, b]


def init_lai_params(key, length, layer_nodes):
    D = length
    n = list(layer_nodes)
    m = len(n)
    params = []
    keys = iter(jax.random.split(key, 4 * m + 8))
    for i in range(m):                               # input transforms
        params += _linear(next(keys), n[i], D)
    params += _linear(next(keys), n[0], n[0])        # forward transforms
    for i in range(1, m):
        params += _linear_dual(next(keys), n[i - 1], n[i], n[i])
    params += _linear(next(keys), n[m - 1], n[m - 1])   # backward transforms
    for i in range(m - 2, -1, -1):
        params += _linear_dual(next(keys), n[i + 1], n[i], n[i])
    for i in range(m):                               # output transforms
        params += _linear_dual(next(keys), n[i], n[i], n[i])
    return params


# ---------------------------------------------------------------------------
# Host-side packing: transpose once, embed at slot offsets, lane-pad once.
# ---------------------------------------------------------------------------
def pack_lai_params(params, length, layer_nodes):
    D = length
    n = list(layer_nodes)
    m = len(n)
    NS = sum(n)
    NP = _round_up(NS, LANE)
    off = [0]
    for n_i in n:
        off.append(off[-1] + n_i)

    it = iter(params)
    pop = lambda: next(it)

    w_in = jnp.zeros((D, NP), jnp.float32)
    w_stack = jnp.zeros((4 * m, NP, NP), jnp.float32)
    b_stack = jnp.zeros((2 * m + 2, 1, NP), jnp.float32)

    # input transforms -> fused (D, NP) matrix, bias row 0
    for i in range(m):
        w, b = pop(), pop()
        w_in = w_in.at[:, off[i]:off[i] + n[i]].set(w.T)
        b_stack = b_stack.at[0, 0, off[i]:off[i] + n[i]].set(b[0])

    k = 0
    # forward transforms
    w, b = pop(), pop()
    w_stack = w_stack.at[k, off[0]:off[0] + n[0], off[0]:off[0] + n[0]].set(w.T)
    b_stack = b_stack.at[1, 0, off[0]:off[0] + n[0]].set(b[0])
    k += 1
    for i in range(1, m):
        w1, w2, b = pop(), pop(), pop()
        w_stack = w_stack.at[k, off[i - 1]:off[i - 1] + n[i - 1],
                             off[i]:off[i] + n[i]].set(w1.T)
        w_stack = w_stack.at[k + 1, off[i]:off[i] + n[i],
                             off[i]:off[i] + n[i]].set(w2.T)
        b_stack = b_stack.at[1 + i, 0, off[i]:off[i] + n[i]].set(b[0])
        k += 2

    # backward transforms
    w, b = pop(), pop()
    L = m - 1
    w_stack = w_stack.at[k, off[L]:off[L] + n[L], off[L]:off[L] + n[L]].set(w.T)
    b_stack = b_stack.at[m + 1, 0, off[L]:off[L] + n[L]].set(b[0])
    k += 1
    for j in range(1, m):
        lyr, prv = m - 1 - j, m - j
        w1, w2, b = pop(), pop(), pop()
        w_stack = w_stack.at[k, off[prv]:off[prv] + n[prv],
                             off[lyr]:off[lyr] + n[lyr]].set(w1.T)
        w_stack = w_stack.at[k + 1, off[lyr]:off[lyr] + n[lyr],
                             off[lyr]:off[lyr] + n[lyr]].set(w2.T)
        b_stack = b_stack.at[m + 1 + j, 0, off[lyr]:off[lyr] + n[lyr]].set(b[0])
        k += 2

    # output transforms -> two block-diagonal matrices + one fused bias row
    ko1, ko2 = k, k + 1
    for i in range(m):
        w1, w2, b = pop(), pop(), pop()
        w_stack = w_stack.at[ko1, off[i]:off[i] + n[i], off[i]:off[i] + n[i]].set(w1.T)
        w_stack = w_stack.at[ko2, off[i]:off[i] + n[i], off[i]:off[i] + n[i]].set(w2.T)
        b_stack = b_stack.at[2 * m + 1, 0, off[i]:off[i] + n[i]].set(b[0])

    return w_in, w_stack, b_stack


# ---------------------------------------------------------------------------
# Wrapper: batch-tiled grid, weights resident, one lane-dense output.
# ---------------------------------------------------------------------------
@functools.partial(jax.jit, static_argnames=("layer_nodes",))
def lai_forward(x, packed, layer_nodes):
    w_in, w_stack, b_stack = packed
    n = list(layer_nodes)
    B, D = x.shape
    NP = w_in.shape[1]

    TILE_B = min(_round_up(B, SUBLANE), 512)
    BP = _round_up(B, TILE_B)
    if BP != B:
        x = jnp.pad(x, ((0, BP - B), (0, 0)))

    kernel = make_lai_kernel(len(n))
    out = pl.pallas_call(
        kernel,
        out_shape=jax.ShapeDtypeStruct((BP, NP), jnp.float32),
        grid=(BP // TILE_B,),
        in_specs=[
            pl.BlockSpec((TILE_B, D), lambda i: (i, 0)),         # x: tiled over batch
            pl.BlockSpec(w_in.shape, lambda i: (0, 0)),          # weights stay resident
            pl.BlockSpec(w_stack.shape, lambda i: (0, 0, 0)),
            pl.BlockSpec(b_stack.shape, lambda i: (0, 0, 0)),
        ],
        out_specs=pl.BlockSpec((TILE_B, NP), lambda i: (i, 0)),
        compiler_params=pltpu.CompilerParams(
            dimension_semantics=("parallel",)),
    )(x, w_in, w_stack, b_stack)

    outs, off = [], 0
    for n_i in n:
        outs.append(out[:B, off:off + n_i])
        off += n_i
    return tuple(outs)


# ---------------------------------------------------------------------------
# Pure-JAX reference (mirrors the PyTorch forward exactly, unpacked params).
# ---------------------------------------------------------------------------
def lai_reference(x, params, layer_nodes):
    m = len(layer_nodes)
    it = iter(params)
    pop = lambda: next(it)
    lin = lambda a, w, b: a @ w.T + b
    dual = lambda a1, a2, w1, w2, b: a1 @ w1.T + a2 @ w2.T + b

    x_l = []
    for _ in range(m):
        w, b = pop(), pop()
        x_l.append(lin(x, w, b))

    w, b = pop(), pop()
    fwd = [lin(x_l[0], w, b)]
    for i in range(1, m):
        w1, w2, b = pop(), pop(), pop()
        fwd.append(dual(fwd[i - 1], x_l[i], w1, w2, b))

    w, b = pop(), pop()
    bwd = [lin(x_l[-1], w, b)]
    for j in range(1, m):
        w1, w2, b = pop(), pop(), pop()
        bwd.append(dual(bwd[j - 1], x_l[-j - 1], w1, w2, b))
    bwd = list(reversed(bwd))

    outs = []
    for i in range(m):
        w1, w2, b = pop(), pop(), pop()
        outs.append(dual(fwd[i], bwd[i], w1, w2, b))
    return outs


if __name__ == "__main__":
    # Small shapes consistent with the module: flattened feature D, two concept
    # layers (objects=12, affordances=6), batch=8.
    B, D = 8, 32
    layer_nodes = (12, 6)

    key = jax.random.PRNGKey(0)
    k_x, k_p = jax.random.split(key)
    x = jax.random.normal(k_x, (B, D), dtype=jnp.float32)

    params = init_lai_params(k_p, D, layer_nodes)
    packed = pack_lai_params(params, D, layer_nodes)

    outs = lai_forward(x, packed, layer_nodes)
    outs = jax.block_until_ready(outs)

    refs = lai_reference(x, params, layer_nodes)
    for o, r, n_i in zip(outs, refs, layer_nodes):
        assert o.shape == (B, n_i), (o.shape, (B, n_i))
        assert jnp.allclose(o, r, atol=1e-4, rtol=1e-4), "mismatch vs reference"

    print("KERNEL_OK")
</pallas_src>

<mosaic_0001>
module attributes {stable_mosaic.version = 11 : i64} {
  func.func @kernel(%arg0: i32, %arg1: memref<8x32xf32, #tpu.memory_space<vmem>>, %arg2: memref<32x128xf32, #tpu.memory_space<vmem>>, %arg3: memref<8x128x128xf32, #tpu.memory_space<vmem>>, %arg4: memref<6x1x128xf32, #tpu.memory_space<vmem>>, %arg5: memref<8x128xf32, #tpu.memory_space<vmem>>) attributes {dimension_semantics = [#tpu.dimension_semantics<parallel>], iteration_bounds = array<i64: 1>, scalar_prefetch = 0 : i64, scratch_operands = 0 : i64, tpu.core_type = #tpu.core_type<tc>, window_params = [{transform_indices = @transform_0, window_bounds = array<i64: 8, 32>}, {pipeline_mode = #tpu.pipeline_mode<synchronous>, transform_indices = @transform_1, window_bounds = array<i64: 32, 128>}, {pipeline_mode = #tpu.pipeline_mode<synchronous>, transform_indices = @transform_2, window_bounds = array<i64: 8, 128, 128>}, {pipeline_mode = #tpu.pipeline_mode<synchronous>, transform_indices = @transform_3, window_bounds = array<i64: 6, 1, 128>}, {transform_indices = @transform_4, window_bounds = array<i64: 8, 128>}]} {
    %c0 = arith.constant 0 : index
    %c0_0 = arith.constant 0 : index
    %0 = vector.load %arg1[%c0, %c0_0] : memref<8x32xf32, #tpu.memory_space<vmem>>, vector<8x32xf32>
    %c0_1 = arith.constant 0 : index
    %c0_2 = arith.constant 0 : index
    %1 = vector.load %arg2[%c0_1, %c0_2] : memref<32x128xf32, #tpu.memory_space<vmem>>, vector<32x128xf32>
    %cst = arith.constant dense<0.000000e+00> : vector<8x128xf32>
    %2 = tpu.matmul %0, %1, %cst {dimension_numbers = #tpu.dot_dimension_numbers<[1], [0], [0], [1], [0, 0, 1, 1], [], []>} : vector<8x32xf32>, vector<32x128xf32>, vector<8x128xf32> -> vector<8x128xf32>
    %c0_3 = arith.constant 0 : index
    %c0_4 = arith.constant 0 : index
    %c0_5 = arith.constant 0 : index
    %3 = vector.load %arg4[%c0_3, %c0_4, %c0_5] : memref<6x1x128xf32, #tpu.memory_space<vmem>>, vector<1x1x128xf32>
    %4 = vector.shape_cast %3 : vector<1x1x128xf32> to vector<1x128xf32>
    %5 = vector.broadcast %4 : vector<1x128xf32> to vector<8x128xf32>
    %6 = arith.addf %2, %5 : vector<8x128xf32>
    %c0_6 = arith.constant 0 : index
    %c0_7 = arith.constant 0 : index
    %c0_8 = arith.constant 0 : index
    %7 = vector.load %arg3[%c0_6, %c0_7, %c0_8] : memref<8x128x128xf32, #tpu.memory_space<vmem>>, vector<1x128x128xf32>
    %8 = vector.shape_cast %7 : vector<1x128x128xf32> to vector<128x128xf32>
    %cst_9 = arith.constant dense<0.000000e+00> : vector<8x128xf32>
    %9 = tpu.matmul %6, %8, %cst_9 {dimension_numbers = #tpu.dot_dimension_numbers<[1], [0], [0], [1], [0, 0, 1, 1], [], []>} : vector<8x128xf32>, vector<128x128xf32>, vector<8x128xf32> -> vector<8x128xf32>
    %c1 = arith.constant 1 : index
    %c0_10 = arith.constant 0 : index
    %c0_11 = arith.constant 0 : index
    %10 = vector.load %arg4[%c1, %c0_10, %c0_11] : memref<6x1x128xf32, #tpu.memory_space<vmem>>, vector<1x1x128xf32>
    %11 = vector.shape_cast %10 : vector<1x1x128xf32> to vector<1x128xf32>
    %12 = vector.broadcast %11 : vector<1x128xf32> to vector<8x128xf32>
    %13 = arith.addf %9, %12 : vector<8x128xf32>
    %c1_12 = arith.constant 1 : index
    %c0_13 = arith.constant 0 : index
    %c0_14 = arith.constant 0 : index
    %14 = vector.load %arg3[%c1_12, %c0_13, %c0_14] : memref<8x128x128xf32, #tpu.memory_space<vmem>>, vector<1x128x128xf32>
    %15 = vector.shape_cast %14 : vector<1x128x128xf32> to vector<128x128xf32>
    %cst_15 = arith.constant dense<0.000000e+00> : vector<8x128xf32>
    %16 = tpu.matmul %13, %15, %cst_15 {dimension_numbers = #tpu.dot_dimension_numbers<[1], [0], [0], [1], [0, 0, 1, 1], [], []>} : vector<8x128xf32>, vector<128x128xf32>, vector<8x128xf32> -> vector<8x128xf32>
    %17 = arith.addf %13, %16 : vector<8x128xf32>
    %c2 = arith.constant 2 : index
    %c0_16 = arith.constant 0 : index
    %c0_17 = arith.constant 0 : index
    %18 = vector.load %arg3[%c2, %c0_16, %c0_17] : memref<8x128x128xf32, #tpu.memory_space<vmem>>, vector<1x128x128xf32>
    %19 = vector.shape_cast %18 : vector<1x128x128xf32> to vector<128x128xf32>
    %cst_18 = arith.constant dense<0.000000e+00> : vector<8x128xf32>
    %20 = tpu.matmul %6, %19, %cst_18 {dimension_numbers = #tpu.dot_dimension_numbers<[1], [0], [0], [1], [0, 0, 1, 1], [], []>} : vector<8x128xf32>, vector<128x128xf32>, vector<8x128xf32> -> vector<8x128xf32>
    %21 = arith.addf %17, %20 : vector<8x128xf32>
    %c2_19 = arith.constant 2 : index
    %c0_20 = arith.constant 0 : index
    %c0_21 = arith.constant 0 : index
    %22 = vector.load %arg4[%c2_19, %c0_20, %c0_21] : memref<6x1x128xf32, #tpu.memory_space<vmem>>, vector<1x1x128xf32>
    %23 = vector.shape_cast %22 : vector<1x1x128xf32> to vector<1x128xf32>
    %24 = vector.broadcast %23 : vector<1x128xf32> to vector<8x128xf32>
    %25 = arith.addf %21, %24 : vector<8x128xf32>
    %c3 = arith.constant 3 : index
    %c0_22 = arith.constant 0 : index
    %c0_23 = arith.constant 0 : index
    %26 = vector.load %arg3[%c3, %c0_22, %c0_23] : memref<8x128x128xf32, #tpu.memory_space<vmem>>, vector<1x128x128xf32>
    %27 = vector.shape_cast %26 : vector<1x128x128xf32> to vector<128x128xf32>
    %cst_24 = arith.constant dense<0.000000e+00> : vector<8x128xf32>
    %28 = tpu.matmul %6, %27, %cst_24 {dimension_numbers = #tpu.dot_dimension_numbers<[1], [0], [0], [1], [0, 0, 1, 1], [], []>} : vector<8x128xf32>, vector<128x128xf32>, vector<8x128xf32> -> vector<8x128xf32>
    %c3_25 = arith.constant 3 : index
    %c0_26 = arith.constant 0 : index
    %c0_27 = arith.constant 0 : index
    %29 = vector.load %arg4[%c3_25, %c0_26, %c0_27] : memref<6x1x128xf32, #tpu.memory_space<vmem>>, vector<1x1x128xf32>
    %30 = vector.shape_cast %29 : vector<1x1x128xf32> to vector<1x128xf32>
    %31 = vector.broadcast %30 : vector<1x128xf32> to vector<8x128xf32>
    %32 = arith.addf %28, %31 : vector<8x128xf32>
    %c4 = arith.constant 4 : index
    %c0_28 = arith.constant 0 : index
    %c0_29 = arith.constant 0 : index
    %33 = vector.load %arg3[%c4, %c0_28, %c0_29] : memref<8x128x128xf32, #tpu.memory_space<vmem>>, vector<1x128x128xf32>
    %34 = vector.shape_cast %33 : vector<1x128x128xf32> to vector<128x128xf32>
    %cst_30 = arith.constant dense<0.000000e+00> : vector<8x128xf32>
    %35 = tpu.matmul %32, %34, %cst_30 {dimension_numbers = #tpu.dot_dimension_numbers<[1], [0], [0], [1], [0, 0, 1, 1], [], []>} : vector<8x128xf32>, vector<128x128xf32>, vector<8x128xf32> -> vector<8x128xf32>
    %36 = arith.addf %32, %35 : vector<8x128xf32>
    %c5 = arith.constant 5 : index
    %c0_31 = arith.constant 0 : index
    %c0_32 = arith.constant 0 : index
    %37 = vector.load %arg3[%c5, %c0_31, %c0_32] : memref<8x128x128xf32, #tpu.memory_space<vmem>>, vector<1x128x128xf32>
    %38 = vector.shape_cast %37 : vector<1x128x128xf32> to vector<128x128xf32>
    %cst_33 = arith.constant dense<0.000000e+00> : vector<8x128xf32>
    %39 = tpu.matmul %6, %38, %cst_33 {dimension_numbers = #tpu.dot_dimension_numbers<[1], [0], [0], [1], [0, 0, 1, 1], [], []>} : vector<8x128xf32>, vector<128x128xf32>, vector<8x128xf32> -> vector<8x128xf32>
    %40 = arith.addf %36, %39 : vector<8x128xf32>
    %c4_34 = arith.constant 4 : index
    %c0_35 = arith.constant 0 : index
    %c0_36 = arith.constant 0 : index
    %41 = vector.load %arg4[%c4_34, %c0_35, %c0_36] : memref<6x1x128xf32, #tpu.memory_space<vmem>>, vector<1x1x128xf32>
    %42 = vector.shape_cast %41 : vector<1x1x128xf32> to vector<1x128xf32>
    %43 = vector.broadcast %42 : vector<1x128xf32> to vector<8x128xf32>
    %44 = arith.addf %40, %43 : vector<8x128xf32>
    %c6 = arith.constant 6 : index
    %c0_37 = arith.constant 0 : index
    %c0_38 = arith.constant 0 : index
    %45 = vector.load %arg3[%c6, %c0_37, %c0_38] : memref<8x128x128xf32, #tpu.memory_space<vmem>>, vector<1x128x128xf32>
    %46 = vector.shape_cast %45 : vector<1x128x128xf32> to vector<128x128xf32>
    %cst_39 = arith.constant dense<0.000000e+00> : vector<8x128xf32>
    %47 = tpu.matmul %25, %46, %cst_39 {dimension_numbers = #tpu.dot_dimension_numbers<[1], [0], [0], [1], [0, 0, 1, 1], [], []>} : vector<8x128xf32>, vector<128x128xf32>, vector<8x128xf32> -> vector<8x128xf32>
    %c7 = arith.constant 7 : index
    %c0_40 = arith.constant 0 : index
    %c0_41 = arith.constant 0 : index
    %48 = vector.load %arg3[%c7, %c0_40, %c0_41] : memref<8x128x128xf32, #tpu.memory_space<vmem>>, vector<1x128x128xf32>
    %49 = vector.shape_cast %48 : vector<1x128x128xf32> to vector<128x128xf32>
    %cst_42 = arith.constant dense<0.000000e+00> : vector<8x128xf32>
    %50 = tpu.matmul %44, %49, %cst_42 {dimension_numbers = #tpu.dot_dimension_numbers<[1], [0], [0], [1], [0, 0, 1, 1], [], []>} : vector<8x128xf32>, vector<128x128xf32>, vector<8x128xf32> -> vector<8x128xf32>
    %51 = arith.addf %47, %50 : vector<8x128xf32>
    %c5_43 = arith.constant 5 : index
    %c0_44 = arith.constant 0 : index
    %c0_45 = arith.constant 0 : index
    %52 = vector.load %arg4[%c5_43, %c0_44, %c0_45] : memref<6x1x128xf32, #tpu.memory_space<vmem>>, vector<1x1x128xf32>
    %53 = vector.shape_cast %52 : vector<1x1x128xf32> to vector<1x128xf32>
    %54 = vector.broadcast %53 : vector<1x128xf32> to vector<8x128xf32>
    %55 = arith.addf %51, %54 : vector<8x128xf32>
    %c0_46 = arith.constant 0 : index
    %c0_47 = arith.constant 0 : index
    %56 = vector.load %arg5[%c0_46, %c0_47] : memref<8x128xf32, #tpu.memory_space<vmem>>, vector<8x128xf32>
    tpu.vector_store %arg5[%c0_46, %c0_47], %55 {strides = array<i32>} : memref<8x128xf32, #tpu.memory_space<vmem>>, vector<8x128xf32>,
    return
  }
  func.func @transform_0(%arg0: i32) -> (i32, i32) {
    %c0_i32 = arith.constant 0 : i32
    %c0_i32_0 = arith.constant 0 : i32
    return %arg0, %c0_i32 : i32, i32
  }
  func.func @transform_1(%arg0: i32) -> (i32, i32) {
    %c0_i32 = arith.constant 0 : i32
    %c0_i32_0 = arith.constant 0 : i32
    %c0_i32_1 = arith.constant 0 : i32
    return %c0_i32, %c0_i32_0 : i32, i32
  }
  func.func @transform_2(%arg0: i32) -> (i32, i32, i32) {
    %c0_i32 = arith.constant 0 : i32
    %c0_i32_0 = arith.constant 0 : i32
    %c0_i32_1 = arith.constant 0 : i32
    %c0_i32_2 = arith.constant 0 : i32
    return %c0_i32, %c0_i32_0, %c0_i32_1 : i32, i32, i32
  }
  func.func @transform_3(%arg0: i32) -> (i32, i32, i32) {
    %c0_i32 = arith.constant 0 : i32
    %c0_i32_0 = arith.constant 0 : i32
    %c0_i32_1 = arith.constant 0 : i32
    %c0_i32_2 = arith.constant 0 : i32
    return %c0_i32, %c0_i32_0, %c0_i32_1 : i32, i32, i32
  }
  func.func @transform_4(%arg0: i32) -> (i32, i32) {
    %c0_i32 = arith.constant 0 : i32
    %c0_i32_0 = arith.constant 0 : i32
    return %arg0, %c0_i32 : i32, i32
  }
}

</mosaic_0001>

<llo_original>
// kernel: lai_forward.1
$region0: #{lai_forward.1}
  #allocation0 [shape = 'u32[]', space=smem, size = 0x4, offset = 0x4, fixed_abs, tag = 'smem constant byte address 0x4 - core index']
  #allocation1 [shape = 'u32[144,128]{1,0:T(1,128)}', space=vmem, size = 0x12000, scoped, tag = 'internal scratch']
  %s0 = inlined_call_operand.hbm [shape: f32[8,32], index: 0, kind: input, shape index: {}]
  %s1 = inlined_call_operand.hbm [shape: f32[32,128], index: 1, kind: input, shape index: {}]
  %s2 = inlined_call_operand.hbm [shape: f32[8,128,128], index: 2, kind: input, shape index: {}]
  %s3 = inlined_call_operand.hbm [shape: f32[6,1,128], index: 3, kind: input, shape index: {}]
  %s4 = inlined_call_operand.vmem [shape: f32[8,128], index: 4, kind: output, shape index: {}]
  %s5 = sld [smem:[#allocation0]]
  $region42: #{lai_forward.1} parent=0
    _
  %s7 = ssub.s32 1, %s5
  %s8 = scalar_select 0, %s7, %s5
  $region1: #{lai_forward.1} parent=0
    #allocation2 [shape = 'u8[4096]{0}', space=vmem, size = 0x1000, scoped, tag = 'input window, operand 0, single buffered']
    #allocation3 [shape = 's32[1]{0}', space=sflag, size = 0x4, scoped, tag = 'scoped memory for lai_forward.1']
    #allocation4 [shape = 'u8[16384]{0}', space=vmem, size = 0x4000, scoped, tag = 'input window, operand 1, single buffered']
    #allocation5 [shape = 's32[1]{0}', space=sflag, size = 0x4, scoped, tag = 'scoped memory for lai_forward.1']
    #allocation6 [shape = 'u8[524288]{0}', space=vmem, size = 0x80000, scoped, tag = 'input window, operand 2, single buffered']
    #allocation7 [shape = 'u8[3072]{0}', space=vmem, size = 0xc00, scoped, tag = 'input window, operand 3, single buffered']
    #allocation8 [shape = 's32[1]{0}', space=sflag, size = 0x4, scoped, tag = 'scoped memory for lai_forward.1']
    %9 = vsyncpa [#allocation3], 0
    %10 = vsyncpa [#allocation5], 0
    %11 = vsyncpa [#allocation8], 0
    // Predicated region
    $region2: #{lai_forward.1} parent=1 // pred_check
      _
    $region3: #{lai_forward.1} parent=1 // pred_check_branch
      %13 = sbr.rel (0) target = $region5
    $region4: #{lai_forward.1} parent=1 // pred_region
      %s15 = ssub.s32 128, 128
      %16 = vsyncadd [#allocation3], %s15
      %s18 = sshll.u32 [#allocation2], 4
      %s19 = int_to_ptr.vmem [resolvable:$true] %s18
      %21 = dma.hbm_to_vmem [thread:$0]  %s0, 128, %s19, [#allocation3]
    $region5: #{lai_forward.1} parent=1 // pred_fallthru
      _
    // Predicated region
    $region6: #{lai_forward.1} parent=1 // pred_check
      _
    $region7: #{lai_forward.1} parent=1 // pred_check_branch
      %23 = sbr.rel (0) target = $region9
    $region8: #{lai_forward.1} parent=1 // pred_region
      %s25 = ssub.s32 512, 512
      %26 = vsyncadd [#allocation5], %s25
      %s27 = sshll.u32 [#allocation4], 4
      %s28 = int_to_ptr.vmem [resolvable:$true] %s27
      %33 = dma.hbm_to_vmem [thread:$0]  %s1, 512, %s28, [#allocation5], 128, 128, 8
    $region9: #{lai_forward.1} parent=1 // pred_fallthru
      _
    // Predicated region
    $region10: #{lai_forward.1} parent=1 // pred_check
      _
    $region11: #{lai_forward.1} parent=1 // pred_check_branch
      %35 = sbr.rel (0) target = $region13
    $region12: #{lai_forward.1} parent=1 // pred_region
      %s37 = ssub.s32 16384, 16384
      %38 = vsyncadd [#allocation5], %s37
      %s39 = sshll.u32 [#allocation6], 4
      %s40 = int_to_ptr.vmem [resolvable:$true] %s39
      %45 = dma.hbm_to_vmem [thread:$0]  %s2, 16384, %s40, [#allocation5], 128, 128, 8
    $region13: #{lai_forward.1} parent=1 // pred_fallthru
      _
    // Predicated region
    $region14: #{lai_forward.1} parent=1 // pred_check
      _
    $region15: #{lai_forward.1} parent=1 // pred_check_branch
      %47 = sbr.rel (0) target = $region17
    $region16: #{lai_forward.1} parent=1 // pred_region
      %s49 = ssub.s32 96, 96
      %50 = vsyncadd [#allocation8], %s49
      %s51 = sshll.u32 [#allocation7], 4
      %s52 = int_to_ptr.vmem [resolvable:$true] %s51
      %57 = dma.hbm_to_vmem [thread:$0]  %s3, 96, %s52, [#allocation8], 16, 16, 1
    $region17: #{lai_forward.1} parent=1 // pred_fallthru
      _
    // Predicated region
    $region18: #{lai_forward.1} parent=1 // pred_check
      _
    $region19: #{lai_forward.1} parent=1 // pred_check_branch
      %59 = sbr.rel (0) target = $region21
    $region20: #{lai_forward.1} parent=1 // pred_region
      %60 = dma.done [#allocation3], 128
    $region21: #{lai_forward.1} parent=1 // pred_fallthru
      _
    // Predicated region
    $region22: #{lai_forward.1} parent=1 // pred_check
      _
    $region23: #{lai_forward.1} parent=1 // pred_check_branch
      %62 = sbr.rel (0) target = $region25
    $region24: #{lai_forward.1} parent=1 // pred_region
      %63 = dma.done [#allocation5], 512
    $region25: #{lai_forward.1} parent=1 // pred_fallthru
      _
    // Predicated region
    $region26: #{lai_forward.1} parent=1 // pred_check
      _
    $region27: #{lai_forward.1} parent=1 // pred_check_branch
      %65 = sbr.rel (0) target = $region29
    $region28: #{lai_forward.1} parent=1 // pred_region
      %66 = dma.done [#allocation5], 16384
    $region29: #{lai_forward.1} parent=1 // pred_fallthru
      _
    // Predicated region
    $region30: #{lai_forward.1} parent=1 // pred_check
      _
    $region31: #{lai_forward.1} parent=1 // pred_check_branch
      %68 = sbr.rel (0) target = $region33
    $region32: #{lai_forward.1} parent=1 // pred_region
      %69 = dma.done [#allocation8], 96
    $region33: #{lai_forward.1} parent=1 // pred_fallthru
      _
    %v70 = vld [vmem:[#allocation2] sm:$0xff]
    %v71 = vld [vmem:[#allocation4] sm:$0xff]
    %v72 = vld [vmem:[#allocation4 + $0x8] sm:$0xff]
    %v73 = vld [vmem:[#allocation4 + $0x10] sm:$0xff]
    %v74 = vld [vmem:[#allocation4 + $0x18] sm:$0xff]
    %v75 = vld [vmem:[#allocation7] sm:$0x1]
    %v77 = vlaneseq
    %v78 = vshrl.u32 %v77, 7
    %v79 = vsub.s32 0, %v78
    %v80 = vrot.slane %v75, %v79
    %vm82 = vcmask 261120
    %v84 = vsel %vm82, %v70, 0
    %86 = vmatprep.subr.mxu0 0.0
    %87 = vmatpush1.msra.mxu0 0.0
    %88 = vmatprep.subr.mxu0 0.0
    %89 = vmatpush1.msra.mxu0 0.0
    %90 = vmatprep.subr.mxu0 0.0
    %91 = vmatpush1.msra.mxu0 0.0
    %92 = vmatprep.subr.mxu0 0.0
    %93 = vmatpush1.msra.mxu0 0.0
    %94 = vmatprep.subr.mxu0 0.0
    %95 = vmatpush1.msra.mxu0 0.0
    %96 = vmatprep.subr.mxu0 0.0
    %97 = vmatpush1.msra.mxu0 0.0
    %98 = vmatprep.subr.mxu0 0.0
    %99 = vmatpush1.msra.mxu0 0.0
    %100 = vmatprep.subr.mxu0 0.0
    %101 = vmatpush1.msra.mxu0 0.0
    %102 = vmatprep.subr.mxu0 0.0
    %103 = vmatpush1.msra.mxu0 0.0
    %104 = vmatprep.subr.mxu0 0.0
    %105 = vmatpush1.msra.mxu0 0.0
    %106 = vmatprep.subr.mxu0 0.0
    %107 = vmatpush1.msra.mxu0 0.0
    %108 = vmatprep.subr.mxu0 0.0
    %109 = vmatpush1.msra.mxu0 0.0
    %110 = vmatprep.subr.mxu0 0.0
    %111 = vmatpush1.msra.mxu0 %v74
    %112 = vmatprep.subr.mxu0 0.0
    %113 = vmatpush1.msra.mxu0 %v73
    %114 = vmatprep.subr.mxu0 0.0
    %115 = vmatpush1.msra.mxu0 %v72
    %116 = vmatprep.subr.mxu0 0.0
    %117 = vmatpush1.msra.mxu0 %v71
    %118 = vmatprep.subr.mxu0 0.0
    %119 = vmatpush2.msra.mxu0 0.0
    %120 = vmatprep.subr.mxu0 0.0
    %121 = vmatpush2.msra.mxu0 0.0
    %122 = vmatprep.subr.mxu0 0.0
    %123 = vmatpush2.msra.mxu0 0.0
    %124 = vmatprep.subr.mxu0 0.0
    %125 = vmatpush2.msra.mxu0 0.0
    %126 = vmatprep.subr.mxu0 0.0
    %127 = vmatpush2.msra.mxu0 0.0
    %128 = vmatprep.subr.mxu0 0.0
    %129 = vmatpush2.msra.mxu0 0.0
    %130 = vmatprep.subr.mxu0 0.0
    %131 = vmatpush2.msra.mxu0 0.0
    %132 = vmatprep.subr.mxu0 0.0
    %133 = vmatpush2.msra.mxu0 0.0
    %134 = vmatprep.subr.mxu0 0.0
    %135 = vmatpush2.msra.mxu0 0.0
    %136 = vmatprep.subr.mxu0 0.0
    %137 = vmatpush2.msra.mxu0 0.0
    %138 = vmatprep.subr.mxu0 0.0
    %139 = vmatpush2.msra.mxu0 0.0
    %140 = vmatprep.subr.mxu0 0.0
    %141 = vmatpush2.msra.mxu0 0.0
    %142 = vmatprep.subr.mxu0 0.0
    %143 = vmatpush2.msra.mxu0 0.0
    %144 = vmatprep.subr.mxu0 0.0
    %145 = vmatpush2.msra.mxu0 0.0
    %146 = vmatprep.subr.mxu0 0.0
    %147 = vmatpush2.msra.mxu0 0.0
    %148 = vmatprep.subr.mxu0 0.0
    %149 = vmatpush2.msra.mxu0 0.0
    %150 = vmatprep.mubr.f32.mxu0 0.0
    %151 = vmatmul.mubr.f32.gmra.mxu0 %v84
    %v152 = vpop.f32.mrf.mxu0
    %v153 = vadd.f32 %v80, %v152
    %v154 = vpop.f32.mrf.mxu0
    %155 = vdwg.mxu0
    %v156 = vld [vmem:[#allocation6] sm:$0xff]
    %v157 = vld [vmem:[#allocation6 + $0x8] sm:$0xff]
    %v158 = vld [vmem:[#allocation6 + $0x10] sm:$0xff]
    %v159 = vld [vmem:[#allocation6 + $0x18] sm:$0xff]
    %v160 = vld [vmem:[#allocation6 + $0x20] sm:$0xff]
    %v161 = vld [vmem:[#allocation6 + $0x28] sm:$0xff]
    %v162 = vld [vmem:[#allocation6 + $0x30] sm:$0xff]
    %v163 = vld [vmem:[#allocation6 + $0x38] sm:$0xff]
    %v164 = vld [vmem:[#allocation6 + $0x40] sm:$0xff]
    %v165 = vld [vmem:[#allocation6 + $0x48] sm:$0xff]
    %v166 = vld [vmem:[#allocation6 + $0x50] sm:$0xff]
    %v167 = vld [vmem:[#allocation6 + $0x58] sm:$0xff]
    %v168 = vld [vmem:[#allocation6 + $0x60] sm:$0xff]
    %v169 = vld [vmem:[#allocation6 + $0x68] sm:$0xff]
    %v170 = vld [vmem:[#allocation6 + $0x70] sm:$0xff]
    %v171 = vld [vmem:[#allocation6 + $0x78] sm:$0xff]
    %s172 = scalar_lea.vmem [#allocation7], 1
    %v173 = vld [vmem:[%s172] sm:$0x1]
    %v175 = vlaneseq
    %v176 = vshrl.u32 %v175, 7
    %v177 = vsub.s32 0, %v176
    %v178 = vrot.slane %v173, %v177
    %180 = vmatprep.subr.mxu0 0.0
    %181 = vmatpush1.msra.mxu0 %v171
    %182 = vmatprep.subr.mxu0 0.0
    %183 = vmatpush1.msra.mxu0 %v170
    %184 = vmatprep.subr.mxu0 0.0
    %185 = vmatpush1.msra.mxu0 %v169
    %186 = vmatprep.subr.mxu0 0.0
    %187 = vmatpush1.msra.mxu0 %v168
    %188 = vmatprep.subr.mxu0 0.0
    %189 = vmatpush1.msra.mxu0 %v167
    %190 = vmatprep.subr.mxu0 0.0
    %191 = vmatpush1.msra.mxu0 %v166
    %192 = vmatprep.subr.mxu0 0.0
    %193 = vmatpush1.msra.mxu0 %v165
    %194 = vmatprep.subr.mxu0 0.0
    %195 = vmatpush1.msra.mxu0 %v164
    %196 = vmatprep.subr.mxu0 0.0
    %197 = vmatpush1.msra.mxu0 %v163
    %198 = vmatprep.subr.mxu0 0.0
    %199 = vmatpush1.msra.mxu0 %v162
    %200 = vmatprep.subr.mxu0 0.0
    %201 = vmatpush1.msra.mxu0 %v161
    %202 = vmatprep.subr.mxu0 0.0
    %203 = vmatpush1.msra.mxu0 %v160
    %204 = vmatprep.subr.mxu0 0.0
    %205 = vmatpush1.msra.mxu0 %v159
    %206 = vmatprep.subr.mxu0 0.0
    %207 = vmatpush1.msra.mxu0 %v158
    %208 = vmatprep.subr.mxu0 0.0
    %209 = vmatpush1.msra.mxu0 %v157
    %210 = vmatprep.subr.mxu0 0.0
    %211 = vmatpush1.msra.mxu0 %v156
    %212 = vmatprep.subr.mxu0 0.0
    %213 = vmatpush2.msra.mxu0 0.0
    %214 = vmatprep.subr.mxu0 0.0
    %215 = vmatpush2.msra.mxu0 0.0
    %216 = vmatprep.subr.mxu0 0.0
    %217 = vmatpush2.msra.mxu0 0.0
    %218 = vmatprep.subr.mxu0 0.0
    %219 = vmatpush2.msra.mxu0 0.0
    %220 = vmatprep.subr.mxu0 0.0
    %221 = vmatpush2.msra.mxu0 0.0
    %222 = vmatprep.subr.mxu0 0.0
    %223 = vmatpush2.msra.mxu0 0.0
    %224 = vmatprep.subr.mxu0 0.0
    %225 = vmatpush2.msra.mxu0 0.0
    %226 = vmatprep.subr.mxu0 0.0
    %227 = vmatpush2.msra.mxu0 0.0
    %228 = vmatprep.subr.mxu0 0.0
    %229 = vmatpush2.msra.mxu0 0.0
    %230 = vmatprep.subr.mxu0 0.0
    %231 = vmatpush2.msra.mxu0 0.0
    %232 = vmatprep.subr.mxu0 0.0
    %233 = vmatpush2.msra.mxu0 0.0
    %234 = vmatprep.subr.mxu0 0.0
    %235 = vmatpush2.msra.mxu0 0.0
    %236 = vmatprep.subr.mxu0 0.0
    %237 = vmatpush2.msra.mxu0 0.0
    %238 = vmatprep.subr.mxu0 0.0
    %239 = vmatpush2.msra.mxu0 0.0
    %240 = vmatprep.subr.mxu0 0.0
    %241 = vmatpush2.msra.mxu0 0.0
    %242 = vmatprep.subr.mxu0 0.0
    %243 = vmatpush2.msra.mxu0 0.0
    %244 = vmatprep.mubr.f32.mxu0 0.0
    %245 = vmatmul.mubr.f32.gmra.mxu0 %v153
    %v246 = vpop.f32.mrf.mxu0
    %v247 = vadd.f32 %v178, %v246
    %v248 = vpop.f32.mrf.mxu0
    %249 = vdwg.mxu0
    %s250 = scalar_lea.vmem [#allocation6], 128
    %v251 = vld [vmem:[%s250] sm:$0xff]
    %v252 = vld [vmem:[%s250 + $0x8] sm:$0xff]
    %v253 = vld [vmem:[%s250 + $0x10] sm:$0xff]
    %v254 = vld [vmem:[%s250 + $0x18] sm:$0xff]
    %v255 = vld [vmem:[%s250 + $0x20] sm:$0xff]
    %v256 = vld [vmem:[%s250 + $0x28] sm:$0xff]
    %v257 = vld [vmem:[%s250 + $0x30] sm:$0xff]
    %v258 = vld [vmem:[%s250 + $0x38] sm:$0xff]
    %v259 = vld [vmem:[%s250 + $0x40] sm:$0xff]
    %v260 = vld [vmem:[%s250 + $0x48] sm:$0xff]
    %v261 = vld [vmem:[%s250 + $0x50] sm:$0xff]
    %v262 = vld [vmem:[%s250 + $0x58] sm:$0xff]
    %v263 = vld [vmem:[%s250 + $0x60] sm:$0xff]
    %v264 = vld [vmem:[%s250 + $0x68] sm:$0xff]
    %v265 = vld [vmem:[%s250 + $0x70] sm:$0xff]
    %v266 = vld [vmem:[%s250 + $0x78] sm:$0xff]
    %267 = vmatprep.subr.mxu0 0.0
    %268 = vmatpush1.msra.mxu0 %v266
    %269 = vmatprep.subr.mxu0 0.0
    %270 = vmatpush1.msra.mxu0 %v265
    %271 = vmatprep.subr.mxu0 0.0
    %272 = vmatpush1.msra.mxu0 %v264
    %273 = vmatprep.subr.mxu0 0.0
    %274 = vmatpush1.msra.mxu0 %v263
    %275 = vmatprep.subr.mxu0 0.0
    %276 = vmatpush1.msra.mxu0 %v262
    %277 = vmatprep.subr.mxu0 0.0
    %278 = vmatpush1.msra.mxu0 %v261
    %279 = vmatprep.subr.mxu0 0.0
    %280 = vmatpush1.msra.mxu0 %v260
    %281 = vmatprep.subr.mxu0 0.0
    %282 = vmatpush1.msra.mxu0 %v259
    %283 = vmatprep.subr.mxu0 0.0
    %284 = vmatpush1.msra.mxu0 %v258
    %285 = vmatprep.subr.mxu0 0.0
    %286 = vmatpush1.msra.mxu0 %v257
    %287 = vmatprep.subr.mxu0 0.0
    %288 = vmatpush1.msra.mxu0 %v256
    %289 = vmatprep.subr.mxu0 0.0
    %290 = vmatpush1.msra.mxu0 %v255
    %291 = vmatprep.subr.mxu0 0.0
    %292 = vmatpush1.msra.mxu0 %v254
    %293 = vmatprep.subr.mxu0 0.0
    %294 = vmatpush1.msra.mxu0 %v253
    %295 = vmatprep.subr.mxu0 0.0
    %296 = vmatpush1.msra.mxu0 %v252
    %297 = vmatprep.subr.mxu0 0.0
    %298 = vmatpush1.msra.mxu0 %v251
    %299 = vmatprep.subr.mxu0 0.0
    %300 = vmatpush2.msra.mxu0 0.0
    %301 = vmatprep.subr.mxu0 0.0
    %302 = vmatpush2.msra.mxu0 0.0
    %303 = vmatprep.subr.mxu0 0.0
    %304 = vmatpush2.msra.mxu0 0.0
    %305 = vmatprep.subr.mxu0 0.0
    %306 = vmatpush2.msra.mxu0 0.0
    %307 = vmatprep.subr.mxu0 0.0
    %308 = vmatpush2.msra.mxu0 0.0
    %309 = vmatprep.subr.mxu0 0.0
    %310 = vmatpush2.msra.mxu0 0.0
    %311 = vmatprep.subr.mxu0 0.0
    %312 = vmatpush2.msra.mxu0 0.0
    %313 = vmatprep.subr.mxu0 0.0
    %314 = vmatpush2.msra.mxu0 0.0
    %315 = vmatprep.subr.mxu0 0.0
    %316 = vmatpush2.msra.mxu0 0.0
    %317 = vmatprep.subr.mxu0 0.0
    %318 = vmatpush2.msra.mxu0 0.0
    %319 = vmatprep.subr.mxu0 0.0
    %320 = vmatpush2.msra.mxu0 0.0
    %321 = vmatprep.subr.mxu0 0.0
    %322 = vmatpush2.msra.mxu0 0.0
    %323 = vmatprep.subr.mxu0 0.0
    %324 = vmatpush2.msra.mxu0 0.0
    %325 = vmatprep.subr.mxu0 0.0
    %326 = vmatpush2.msra.mxu0 0.0
    %327 = vmatprep.subr.mxu0 0.0
    %328 = vmatpush2.msra.mxu0 0.0
    %329 = vmatprep.subr.mxu0 0.0
    %330 = vmatpush2.msra.mxu0 0.0
    %331 = vmatprep.mubr.f32.mxu0 0.0
    %332 = vmatmul.mubr.f32.gmra.mxu0 %v247
    %v333 = vpop.f32.mrf.mxu0
    %v334 = vadd.f32 0.0, %v333
    %v335 = vpop.f32.mrf.mxu0
    %336 = vdwg.mxu0
    %v337 = vadd.f32 %v247, %v334
    %s338 = scalar_lea.vmem [#allocation6], 256
    %v339 = vld [vmem:[%s338] sm:$0xff]
    %v340 = vld [vmem:[%s338 + $0x8] sm:$0xff]
    %v341 = vld [vmem:[%s338 + $0x10] sm:$0xff]
    %v342 = vld [vmem:[%s338 + $0x18] sm:$0xff]
    %v343 = vld [vmem:[%s338 + $0x20] sm:$0xff]
    %v344 = vld [vmem:[%s338 + $0x28] sm:$0xff]
    %v345 = vld [vmem:[%s338 + $0x30] sm:$0xff]
    %v346 = vld [vmem:[%s338 + $0x38] sm:$0xff]
    %v347 = vld [vmem:[%s338 + $0x40] sm:$0xff]
    %v348 = vld [vmem:[%s338 + $0x48] sm:$0xff]
    %v349 = vld [vmem:[%s338 + $0x50] sm:$0xff]
    %v350 = vld [vmem:[%s338 + $0x58] sm:$0xff]
    %v351 = vld [vmem:[%s338 + $0x60] sm:$0xff]
    %v352 = vld [vmem:[%s338 + $0x68] sm:$0xff]
    %v353 = vld [vmem:[%s338 + $0x70] sm:$0xff]
    %v354 = vld [vmem:[%s338 + $0x78] sm:$0xff]
    %355 = vmatprep.subr.mxu0 0.0
    %356 = vmatpush1.msra.mxu0 %v354
    %357 = vmatprep.subr.mxu0 0.0
    %358 = vmatpush1.msra.mxu0 %v353
    %359 = vmatprep.subr.mxu0 0.0
    %360 = vmatpush1.msra.mxu0 %v352
    %361 = vmatprep.subr.mxu0 0.0
    %362 = vmatpush1.msra.mxu0 %v351
    %363 = vmatprep.subr.mxu0 0.0
    %364 = vmatpush1.msra.mxu0 %v350
    %365 = vmatprep.subr.mxu0 0.0
    %366 = vmatpush1.msra.mxu0 %v349
    %367 = vmatprep.subr.mxu0 0.0
    %368 = vmatpush1.msra.mxu0 %v348
    %369 = vmatprep.subr.mxu0 0.0
    %370 = vmatpush1.msra.mxu0 %v347
    %371 = vmatprep.subr.mxu0 0.0
    %372 = vmatpush1.msra.mxu0 %v346
    %373 = vmatprep.subr.mxu0 0.0
    %374 = vmatpush1.msra.mxu0 %v345
    %375 = vmatprep.subr.mxu0 0.0
    %376 = vmatpush1.msra.mxu0 %v344
    %377 = vmatprep.subr.mxu0 0.0
    %378 = vmatpush1.msra.mxu0 %v343
    %379 = vmatprep.subr.mxu0 0.0
    %380 = vmatpush1.msra.mxu0 %v342
    %381 = vmatprep.subr.mxu0 0.0
    %382 = vmatpush1.msra.mxu0 %v341
    %383 = vmatprep.subr.mxu0 0.0
    %384 = vmatpush1.msra.mxu0 %v340
    %385 = vmatprep.subr.mxu0 0.0
    %386 = vmatpush1.msra.mxu0 %v339
    %387 = vmatprep.subr.mxu0 0.0
    %388 = vmatpush2.msra.mxu0 0.0
    %389 = vmatprep.subr.mxu0 0.0
    %390 = vmatpush2.msra.mxu0 0.0
    %391 = vmatprep.subr.mxu0 0.0
    %392 = vmatpush2.msra.mxu0 0.0
    %393 = vmatprep.subr.mxu0 0.0
    %394 = vmatpush2.msra.mxu0 0.0
    %395 = vmatprep.subr.mxu0 0.0
    %396 = vmatpush2.msra.mxu0 0.0
    %397 = vmatprep.subr.mxu0 0.0
    %398 = vmatpush2.msra.mxu0 0.0
    %399 = vmatprep.subr.mxu0 0.0
    %400 = vmatpush2.msra.mxu0 0.0
    %401 = vmatprep.subr.mxu0 0.0
    %402 = vmatpush2.msra.mxu0 0.0
    %403 = vmatprep.subr.mxu0 0.0
    %404 = vmatpush2.msra.mxu0 0.0
    %405 = vmatprep.subr.mxu0 0.0
    %406 = vmatpush2.msra.mxu0 0.0
    %407 = vmatprep.subr.mxu0 0.0
    %408 = vmatpush2.msra.mxu0 0.0
    %409 = vmatprep.subr.mxu0 0.0
    %410 = vmatpush2.msra.mxu0 0.0
    %411 = vmatprep.subr.mxu0 0.0
    %412 = vmatpush2.msra.mxu0 0.0
    %413 = vmatprep.subr.mxu0 0.0
    %414 = vmatpush2.msra.mxu0 0.0
    %415 = vmatprep.subr.mxu0 0.0
    %416 = vmatpush2.msra.mxu0 0.0
    %417 = vmatprep.subr.mxu0 0.0
    %418 = vmatpush2.msra.mxu0 0.0
    %419 = vmatprep.mubr.f32.mxu0 0.0
    %420 = vmatmul.mubr.f32.gmra.mxu0 %v153
    %v421 = vpop.f32.mrf.mxu0
    %v422 = vadd.f32 0.0, %v421
    %v423 = vpop.f32.mrf.mxu0
    %424 = vdwg.mxu0
    %v425 = vadd.f32 %v337, %v422
    %s426 = scalar_lea.vmem [#allocation7], 2
    %v427 = vld [vmem:[%s426] sm:$0x1]
    %v429 = vlaneseq
    %v430 = vshrl.u32 %v429, 7
    %v431 = vsub.s32 0, %v430
    %v432 = vrot.slane %v427, %v431
    %v434 = vadd.f32 %v425, %v432
    %s435 = scalar_lea.vmem [#allocation6], 384
    %v436 = vld [vmem:[%s435] sm:$0xff]
    %v437 = vld [vmem:[%s435 + $0x8] sm:$0xff]
    %v438 = vld [vmem:[%s435 + $0x10] sm:$0xff]
    %v439 = vld [vmem:[%s435 + $0x18] sm:$0xff]
    %v440 = vld [vmem:[%s435 + $0x20] sm:$0xff]
    %v441 = vld [vmem:[%s435 + $0x28] sm:$0xff]
    %v442 = vld [vmem:[%s435 + $0x30] sm:$0xff]
    %v443 = vld [vmem:[%s435 + $0x38] sm:$0xff]
    %v444 = vld [vmem:[%s435 + $0x40] sm:$0xff]
    %v445 = vld [vmem:[%s435 + $0x48] sm:$0xff]
    %v446 = vld [vmem:[%s435 + $0x50] sm:$0xff]
    %v447 = vld [vmem:[%s435 + $0x58] sm:$0xff]
    %v448 = vld [vmem:[%s435 + $0x60] sm:$0xff]
    %v449 = vld [vmem:[%s435 + $0x68] sm:$0xff]
    %v450 = vld [vmem:[%s435 + $0x70] sm:$0xff]
    %v451 = vld [vmem:[%s435 + $0x78] sm:$0xff]
    %s452 = scalar_lea.vmem [#allocation7], 3
    %v453 = vld [vmem:[%s452] sm:$0x1]
    %v455 = vlaneseq
    %v456 = vshrl.u32 %v455, 7
    %v457 = vsub.s32 0, %v456
    %v458 = vrot.slane %v453, %v457
    %460 = vmatprep.subr.mxu0 0.0
    %461 = vmatpush1.msra.mxu0 %v451
    %462 = vmatprep.subr.mxu0 0.0
    %463 = vmatpush1.msra.mxu0 %v450
    %464 = vmatprep.subr.mxu0 0.0
    %465 = vmatpush1.msra.mxu0 %v449
    %466 = vmatprep.subr.mxu0 0.0
    %467 = vmatpush1.msra.mxu0 %v448
    %468 = vmatprep.subr.mxu0 0.0
    %469 = vmatpush1.msra.mxu0 %v447
    %470 = vmatprep.subr.mxu0 0.0
    %471 = vmatpush1.msra.mxu0 %v446
    %472 = vmatprep.subr.mxu0 0.0
    %473 = vmatpush1.msra.mxu0 %v445
    %474 = vmatprep.subr.mxu0 0.0
    %475 = vmatpush1.msra.mxu0 %v444
    %476 = vmatprep.subr.mxu0 0.0
    %477 = vmatpush1.msra.mxu0 %v443
    %478 = vmatprep.subr.mxu0 0.0
    %479 = vmatpush1.msra.mxu0 %v442
    %480 = vmatprep.subr.mxu0 0.0
    %481 = vmatpush1.msra.mxu0 %v441
    %482 = vmatprep.subr.mxu0 0.0
    %483 = vmatpush1.msra.mxu0 %v440
    %484 = vmatprep.subr.mxu0 0.0
    %485 = vmatpush1.msra.mxu0 %v439
    %486 = vmatprep.subr.mxu0 0.0
    %487 = vmatpush1.msra.mxu0 %v438
    %488 = vmatprep.subr.mxu0 0.0
    %489 = vmatpush1.msra.mxu0 %v437
    %490 = vmatprep.subr.mxu0 0.0
    %491 = vmatpush1.msra.mxu0 %v436
    %492 = vmatprep.subr.mxu0 0.0
    %493 = vmatpush2.msra.mxu0 0.0
    %494 = vmatprep.subr.mxu0 0.0
    %495 = vmatpush2.msra.mxu0 0.0
    %496 = vmatprep.subr.mxu0 0.0
    %497 = vmatpush2.msra.mxu0 0.0
    %498 = vmatprep.subr.mxu0 0.0
    %499 = vmatpush2.msra.mxu0 0.0
    %500 = vmatprep.subr.mxu0 0.0
    %501 = vmatpush2.msra.mxu0 0.0
    %502 = vmatprep.subr.mxu0 0.0
    %503 = vmatpush2.msra.mxu0 0.0
    %504 = vmatprep.subr.mxu0 0.0
    %505 = vmatpush2.msra.mxu0 0.0
    %506 = vmatprep.subr.mxu0 0.0
    %507 = vmatpush2.msra.mxu0 0.0
    %508 = vmatprep.subr.mxu0 0.0
    %509 = vmatpush2.msra.mxu0 0.0
    %510 = vmatprep.subr.mxu0 0.0
    %511 = vmatpush2.msra.mxu0 0.0
    %512 = vmatprep.subr.mxu0 0.0
    %513 = vmatpush2.msra.mxu0 0.0
    %514 = vmatprep.subr.mxu0 0.0
    %515 = vmatpush2.msra.mxu0 0.0
    %516 = vmatprep.subr.mxu0 0.0
    %517 = vmatpush2.msra.mxu0 0.0
    %518 = vmatprep.subr.mxu0 0.0
    %519 = vmatpush2.msra.mxu0 0.0
    %520 = vmatprep.subr.mxu0 0.0
    %521 = vmatpush2.msra.mxu0 0.0
    %522 = vmatprep.subr.mxu0 0.0
    %523 = vmatpush2.msra.mxu0 0.0
    %524 = vmatprep.mubr.f32.mxu0 0.0
    %525 = vmatmul.mubr.f32.gmra.mxu0 %v153
    %v526 = vpop.f32.mrf.mxu0
    %v527 = vadd.f32 %v458, %v526
    %v528 = vpop.f32.mrf.mxu0
    %529 = vdwg.mxu0
    %s530 = scalar_lea.vmem [#allocation6], 512
    %v531 = vld [vmem:[%s530] sm:$0xff]
    %v532 = vld [vmem:[%s530 + $0x8] sm:$0xff]
    %v533 = vld [vmem:[%s530 + $0x10] sm:$0xff]
    %v534 = vld [vmem:[%s530 + $0x18] sm:$0xff]
    %v535 = vld [vmem:[%s530 + $0x20] sm:$0xff]
    %v536 = vld [vmem:[%s530 + $0x28] sm:$0xff]
    %v537 = vld [vmem:[%s530 + $0x30] sm:$0xff]
    %v538 = vld [vmem:[%s530 + $0x38] sm:$0xff]
    %v539 = vld [vmem:[%s530 + $0x40] sm:$0xff]
    %v540 = vld [vmem:[%s530 + $0x48] sm:$0xff]
    %v541 = vld [vmem:[%s530 + $0x50] sm:$0xff]
    %v542 = vld [vmem:[%s530 + $0x58] sm:$0xff]
    %v543 = vld [vmem:[%s530 + $0x60] sm:$0xff]
    %v544 = vld [vmem:[%s530 + $0x68] sm:$0xff]
    %v545 = vld [vmem:[%s530 + $0x70] sm:$0xff]
    %v546 = vld [vmem:[%s530 + $0x78] sm:$0xff]
    %547 = vmatprep.subr.mxu0 0.0
    %548 = vmatpush1.msra.mxu0 %v546
    %549 = vmatprep.subr.mxu0 0.0
    %550 = vmatpush1.msra.mxu0 %v545
    %551 = vmatprep.subr.mxu0 0.0
    %552 = vmatpush1.msra.mxu0 %v544
    %553 = vmatprep.subr.mxu0 0.0
    %554 = vmatpush1.msra.mxu0 %v543
    %555 = vmatprep.subr.mxu0 0.0
    %556 = vmatpush1.msra.mxu0 %v542
    %557 = vmatprep.subr.mxu0 0.0
    %558 = vmatpush1.msra.mxu0 %v541
    %559 = vmatprep.subr.mxu0 0.0
    %560 = vmatpush1.msra.mxu0 %v540
    %561 = vmatprep.subr.mxu0 0.0
    %562 = vmatpush1.msra.mxu0 %v539
    %563 = vmatprep.subr.mxu0 0.0
    %564 = vmatpush1.msra.mxu0 %v538
    %565 = vmatprep.subr.mxu0 0.0
    %566 = vmatpush1.msra.mxu0 %v537
    %567 = vmatprep.subr.mxu0 0.0
    %568 = vmatpush1.msra.mxu0 %v536
    %569 = vmatprep.subr.mxu0 0.0
    %570 = vmatpush1.msra.mxu0 %v535
    %571 = vmatprep.subr.mxu0 0.0
    %572 = vmatpush1.msra.mxu0 %v534
    %573 = vmatprep.subr.mxu0 0.0
    %574 = vmatpush1.msra.mxu0 %v533
    %575 = vmatprep.subr.mxu0 0.0
    %576 = vmatpush1.msra.mxu0 %v532
    %577 = vmatprep.subr.mxu0 0.0
    %578 = vmatpush1.msra.mxu0 %v531
    %579 = vmatprep.subr.mxu0 0.0
    %580 = vmatpush2.msra.mxu0 0.0
    %581 = vmatprep.subr.mxu0 0.0
    %582 = vmatpush2.msra.mxu0 0.0
    %583 = vmatprep.subr.mxu0 0.0
    %584 = vmatpush2.msra.mxu0 0.0
    %585 = vmatprep.subr.mxu0 0.0
    %586 = vmatpush2.msra.mxu0 0.0
    %587 = vmatprep.subr.mxu0 0.0
    %588 = vmatpush2.msra.mxu0 0.0
    %589 = vmatprep.subr.mxu0 0.0
    %590 = vmatpush2.msra.mxu0 0.0
    %591 = vmatprep.subr.mxu0 0.0
    %592 = vmatpush2.msra.mxu0 0.0
    %593 = vmatprep.subr.mxu0 0.0
    %594 = vmatpush2.msra.mxu0 0.0
    %595 = vmatprep.subr.mxu0 0.0
    %596 = vmatpush2.msra.mxu0 0.0
    %597 = vmatprep.subr.mxu0 0.0
    %598 = vmatpush2.msra.mxu0 0.0
    %599 = vmatprep.subr.mxu0 0.0
    %600 = vmatpush2.msra.mxu0 0.0
    %601 = vmatprep.subr.mxu0 0.0
    %602 = vmatpush2.msra.mxu0 0.0
    %603 = vmatprep.subr.mxu0 0.0
    %604 = vmatpush2.msra.mxu0 0.0
    %605 = vmatprep.subr.mxu0 0.0
    %606 = vmatpush2.msra.mxu0 0.0
    %607 = vmatprep.subr.mxu0 0.0
    %608 = vmatpush2.msra.mxu0 0.0
    %609 = vmatprep.subr.mxu0 0.0
    %610 = vmatpush2.msra.mxu0 0.0
    %611 = vmatprep.mubr.f32.mxu0 0.0
    %612 = vmatmul.mubr.f32.gmra.mxu0 %v527
    %v613 = vpop.f32.mrf.mxu0
    %v614 = vadd.f32 0.0, %v613
    %v615 = vpop.f32.mrf.mxu0
    %616 = vdwg.mxu0
    %v617 = vadd.f32 %v527, %v614
    %s618 = scalar_lea.vmem [#allocation6], 640
    %v619 = vld [vmem:[%s618] sm:$0xff]
    %v620 = vld [vmem:[%s618 + $0x8] sm:$0xff]
    %v621 = vld [vmem:[%s618 + $0x10] sm:$0xff]
    %v622 = vld [vmem:[%s618 + $0x18] sm:$0xff]
    %v623 = vld [vmem:[%s618 + $0x20] sm:$0xff]
    %v624 = vld [vmem:[%s618 + $0x28] sm:$0xff]
    %v625 = vld [vmem:[%s618 + $0x30] sm:$0xff]
    %v626 = vld [vmem:[%s618 + $0x38] sm:$0xff]
    %v627 = vld [vmem:[%s618 + $0x40] sm:$0xff]
    %v628 = vld [vmem:[%s618 + $0x48] sm:$0xff]
    %v629 = vld [vmem:[%s618 + $0x50] sm:$0xff]
    %v630 = vld [vmem:[%s618 + $0x58] sm:$0xff]
    %v631 = vld [vmem:[%s618 + $0x60] sm:$0xff]
    %v632 = vld [vmem:[%s618 + $0x68] sm:$0xff]
    %v633 = vld [vmem:[%s618 + $0x70] sm:$0xff]
    %v634 = vld [vmem:[%s618 + $0x78] sm:$0xff]
    %635 = vmatprep.subr.mxu0 0.0
    %636 = vmatpush1.msra.mxu0 %v634
    %637 = vmatprep.subr.mxu0 0.0
    %638 = vmatpush1.msra.mxu0 %v633
    %639 = vmatprep.subr.mxu0 0.0
    %640 = vmatpush1.msra.mxu0 %v632
    %641 = vmatprep.subr.mxu0 0.0
    %642 = vmatpush1.msra.mxu0 %v631
    %643 = vmatprep.subr.mxu0 0.0
    %644 = vmatpush1.msra.mxu0 %v630
    %645 = vmatprep.subr.mxu0 0.0
    %646 = vmatpush1.msra.mxu0 %v629
    %647 = vmatprep.subr.mxu0 0.0
    %648 = vmatpush1.msra.mxu0 %v628
    %649 = vmatprep.subr.mxu0 0.0
    %650 = vmatpush1.msra.mxu0 %v627
    %651 = vmatprep.subr.mxu0 0.0
    %652 = vmatpush1.msra.mxu0 %v626
    %653 = vmatprep.subr.mxu0 0.0
    %654 = vmatpush1.msra.mxu0 %v625
    %655 = vmatprep.subr.mxu0 0.0
    %656 = vmatpush1.msra.mxu0 %v624
    %657 = vmatprep.subr.mxu0 0.0
    %658 = vmatpush1.msra.mxu0 %v623
    %659 = vmatprep.subr.mxu0 0.0
    %660 = vmatpush1.msra.mxu0 %v622
    %661 = vmatprep.subr.mxu0 0.0
    %662 = vmatpush1.msra.mxu0 %v621
    %663 = vmatprep.subr.mxu0 0.0
    %664 = vmatpush1.msra.mxu0 %v620
    %665 = vmatprep.subr.mxu0 0.0
    %666 = vmatpush1.msra.mxu0 %v619
    %667 = vmatprep.subr.mxu0 0.0
    %668 = vmatpush2.msra.mxu0 0.0
    %669 = vmatprep.subr.mxu0 0.0
    %670 = vmatpush2.msra.mxu0 0.0
    %671 = vmatprep.subr.mxu0 0.0
    %672 = vmatpush2.msra.mxu0 0.0
    %673 = vmatprep.subr.mxu0 0.0
    %674 = vmatpush2.msra.mxu0 0.0
    %675 = vmatprep.subr.mxu0 0.0
    %676 = vmatpush2.msra.mxu0 0.0
    %677 = vmatprep.subr.mxu0 0.0
    %678 = vmatpush2.msra.mxu0 0.0
    %679 = vmatprep.subr.mxu0 0.0
    %680 = vmatpush2.msra.mxu0 0.0
    %681 = vmatprep.subr.mxu0 0.0
    %682 = vmatpush2.msra.mxu0 0.0
    %683 = vmatprep.subr.mxu0 0.0
    %684 = vmatpush2.msra.mxu0 0.0
    %685 = vmatprep.subr.mxu0 0.0
    %686 = vmatpush2.msra.mxu0 0.0
    %687 = vmatprep.subr.mxu0 0.0
    %688 = vmatpush2.msra.mxu0 0.0
    %689 = vmatprep.subr.mxu0 0.0
    %690 = vmatpush2.msra.mxu0 0.0
    %691 = vmatprep.subr.mxu0 0.0
    %692 = vmatpush2.msra.mxu0 0.0
    %693 = vmatprep.subr.mxu0 0.0
    %694 = vmatpush2.msra.mxu0 0.0
    %695 = vmatprep.subr.mxu0 0.0
    %696 = vmatpush2.msra.mxu0 0.0
    %697 = vmatprep.subr.mxu0 0.0
    %698 = vmatpush2.msra.mxu0 0.0
    %699 = vmatprep.mubr.f32.mxu0 0.0
    %700 = vmatmul.mubr.f32.gmra.mxu0 %v153
    %v701 = vpop.f32.mrf.mxu0
    %v702 = vadd.f32 0.0, %v701
    %v703 = vpop.f32.mrf.mxu0
    %704 = vdwg.mxu0
    %v705 = vadd.f32 %v617, %v702
    %s706 = scalar_lea.vmem [#allocation7], 4
    %v707 = vld [vmem:[%s706] sm:$0x1]
    %v709 = vlaneseq
    %v710 = vshrl.u32 %v709, 7
    %v711 = vsub.s32 0, %v710
    %v712 = vrot.slane %v707, %v711
    %v714 = vadd.f32 %v705, %v712
    %s715 = scalar_lea.vmem [#allocation6], 768
    %v716 = vld [vmem:[%s715] sm:$0xff]
    %v717 = vld [vmem:[%s715 + $0x8] sm:$0xff]
    %v718 = vld [vmem:[%s715 + $0x10] sm:$0xff]
    %v719 = vld [vmem:[%s715 + $0x18] sm:$0xff]
    %v720 = vld [vmem:[%s715 + $0x20] sm:$0xff]
    %v721 = vld [vmem:[%s715 + $0x28] sm:$0xff]
    %v722 = vld [vmem:[%s715 + $0x30] sm:$0xff]
    %v723 = vld [vmem:[%s715 + $0x38] sm:$0xff]
    %v724 = vld [vmem:[%s715 + $0x40] sm:$0xff]
    %v725 = vld [vmem:[%s715 + $0x48] sm:$0xff]
    %v726 = vld [vmem:[%s715 + $0x50] sm:$0xff]
    %v727 = vld [vmem:[%s715 + $0x58] sm:$0xff]
    %v728 = vld [vmem:[%s715 + $0x60] sm:$0xff]
    %v729 = vld [vmem:[%s715 + $0x68] sm:$0xff]
    %v730 = vld [vmem:[%s715 + $0x70] sm:$0xff]
    %v731 = vld [vmem:[%s715 + $0x78] sm:$0xff]
    %s732 = scalar_lea.vmem [#allocation6], 896
    %v733 = vld [vmem:[%s732] sm:$0xff]
    %v734 = vld [vmem:[%s732 + $0x8] sm:$0xff]
    %v735 = vld [vmem:[%s732 + $0x10] sm:$0xff]
    %v736 = vld [vmem:[%s732 + $0x18] sm:$0xff]
    %v737 = vld [vmem:[%s732 + $0x20] sm:$0xff]
    %v738 = vld [vmem:[%s732 + $0x28] sm:$0xff]
    %v739 = vld [vmem:[%s732 + $0x30] sm:$0xff]
    %v740 = vld [vmem:[%s732 + $0x38] sm:$0xff]
    %v741 = vld [vmem:[%s732 + $0x40] sm:$0xff]
    %v742 = vld [vmem:[%s732 + $0x48] sm:$0xff]
    %v743 = vld [vmem:[%s732 + $0x50] sm:$0xff]
    %v744 = vld [vmem:[%s732 + $0x58] sm:$0xff]
    %v745 = vld [vmem:[%s732 + $0x60] sm:$0xff]
    %v746 = vld [vmem:[%s732 + $0x68] sm:$0xff]
    %v747 = vld [vmem:[%s732 + $0x70] sm:$0xff]
    %v748 = vld [vmem:[%s732 + $0x78] sm:$0xff]
    %749 = vmatprep.subr.mxu0 0.0
    %750 = vmatpush1.msra.mxu0 %v748
    %751 = vmatprep.subr.mxu0 0.0
    %752 = vmatpush1.msra.mxu0 %v747
    %753 = vmatprep.subr.mxu0 0.0
    %754 = vmatpush1.msra.mxu0 %v746
    %755 = vmatprep.subr.mxu0 0.0
    %756 = vmatpush1.msra.mxu0 %v745
    %757 = vmatprep.subr.mxu0 0.0
    %758 = vmatpush1.msra.mxu0 %v744
    %759 = vmatprep.subr.mxu0 0.0
    %760 = vmatpush1.msra.mxu0 %v743
    %761 = vmatprep.subr.mxu0 0.0
    %762 = vmatpush1.msra.mxu0 %v742
    %763 = vmatprep.subr.mxu0 0.0
    %764 = vmatpush1.msra.mxu0 %v741
    %765 = vmatprep.subr.mxu0 0.0
    %766 = vmatpush1.msra.mxu0 %v740
    %767 = vmatprep.subr.mxu0 0.0
    %768 = vmatpush1.msra.mxu0 %v739
    %769 = vmatprep.subr.mxu0 0.0
    %770 = vmatpush1.msra.mxu0 %v738
    %771 = vmatprep.subr.mxu0 0.0
    %772 = vmatpush1.msra.mxu0 %v737
    %773 = vmatprep.subr.mxu0 0.0
    %774 = vmatpush1.msra.mxu0 %v736
    %775 = vmatprep.subr.mxu0 0.0
    %776 = vmatpush1.msra.mxu0 %v735
    %777 = vmatprep.subr.mxu0 0.0
    %778 = vmatpush1.msra.mxu0 %v734
    %779 = vmatprep.subr.mxu0 0.0
    %780 = vmatpush1.msra.mxu0 %v733
    %781 = vmatprep.subr.mxu0 0.0
    %782 = vmatpush2.msra.mxu0 0.0
    %783 = vmatprep.subr.mxu0 0.0
    %784 = vmatpush2.msra.mxu0 0.0
    %785 = vmatprep.subr.mxu0 0.0
    %786 = vmatpush2.msra.mxu0 0.0
    %787 = vmatprep.subr.mxu0 0.0
    %788 = vmatpush2.msra.mxu0 0.0
    %789 = vmatprep.subr.mxu0 0.0
    %790 = vmatpush2.msra.mxu0 0.0
    %791 = vmatprep.subr.mxu0 0.0
    %792 = vmatpush2.msra.mxu0 0.0
    %793 = vmatprep.subr.mxu0 0.0
    %794 = vmatpush2.msra.mxu0 0.0
    %795 = vmatprep.subr.mxu0 0.0
    %796 = vmatpush2.msra.mxu0 0.0
    %797 = vmatprep.subr.mxu0 0.0
    %798 = vmatpush2.msra.mxu0 0.0
    %799 = vmatprep.subr.mxu0 0.0
    %800 = vmatpush2.msra.mxu0 0.0
    %801 = vmatprep.subr.mxu0 0.0
    %802 = vmatpush2.msra.mxu0 0.0
    %803 = vmatprep.subr.mxu0 0.0
    %804 = vmatpush2.msra.mxu0 0.0
    %805 = vmatprep.subr.mxu0 0.0
    %806 = vmatpush2.msra.mxu0 0.0
    %807 = vmatprep.subr.mxu0 0.0
    %808 = vmatpush2.msra.mxu0 0.0
    %809 = vmatprep.subr.mxu0 0.0
    %810 = vmatpush2.msra.mxu0 0.0
    %811 = vmatprep.subr.mxu0 0.0
    %812 = vmatpush2.msra.mxu0 0.0
    %813 = vmatprep.mubr.f32.mxu0 0.0
    %814 = vmatmul.mubr.f32.gmra.mxu0 %v714
    %v815 = vpop.f32.mrf.mxu0
    %v816 = vadd.f32 0.0, %v815
    %v817 = vpop.f32.mrf.mxu0
    %818 = vdwg.mxu0
    %819 = vmatprep.subr.mxu0 0.0
    %820 = vmatpush1.msra.mxu0 %v731
    %821 = vmatprep.subr.mxu0 0.0
    %822 = vmatpush1.msra.mxu0 %v730
    %823 = vmatprep.subr.mxu0 0.0
    %824 = vmatpush1.msra.mxu0 %v729
    %825 = vmatprep.subr.mxu0 0.0
    %826 = vmatpush1.msra.mxu0 %v728
    %827 = vmatprep.subr.mxu0 0.0
    %828 = vmatpush1.msra.mxu0 %v727
    %829 = vmatprep.subr.mxu0 0.0
    %830 = vmatpush1.msra.mxu0 %v726
    %831 = vmatprep.subr.mxu0 0.0
    %832 = vmatpush1.msra.mxu0 %v725
    %833 = vmatprep.subr.mxu0 0.0
    %834 = vmatpush1.msra.mxu0 %v724
    %835 = vmatprep.subr.mxu0 0.0
    %836 = vmatpush1.msra.mxu0 %v723
    %837 = vmatprep.subr.mxu0 0.0
    %838 = vmatpush1.msra.mxu0 %v722
    %839 = vmatprep.subr.mxu0 0.0
    %840 = vmatpush1.msra.mxu0 %v721
    %841 = vmatprep.subr.mxu0 0.0
    %842 = vmatpush1.msra.mxu0 %v720
    %843 = vmatprep.subr.mxu0 0.0
    %844 = vmatpush1.msra.mxu0 %v719
    %845 = vmatprep.subr.mxu0 0.0
    %846 = vmatpush1.msra.mxu0 %v718
    %847 = vmatprep.subr.mxu0 0.0
    %848 = vmatpush1.msra.mxu0 %v717
    %849 = vmatprep.subr.mxu0 0.0
    %850 = vmatpush1.msra.mxu0 %v716
    %851 = vmatprep.subr.mxu0 0.0
    %852 = vmatpush2.msra.mxu0 0.0
    %853 = vmatprep.subr.mxu0 0.0
    %854 = vmatpush2.msra.mxu0 0.0
    %855 = vmatprep.subr.mxu0 0.0
    %856 = vmatpush2.msra.mxu0 0.0
    %857 = vmatprep.subr.mxu0 0.0
    %858 = vmatpush2.msra.mxu0 0.0
    %859 = vmatprep.subr.mxu0 0.0
    %860 = vmatpush2.msra.mxu0 0.0
    %861 = vmatprep.subr.mxu0 0.0
    %862 = vmatpush2.msra.mxu0 0.0
    %863 = vmatprep.subr.mxu0 0.0
    %864 = vmatpush2.msra.mxu0 0.0
    %865 = vmatprep.subr.mxu0 0.0
    %866 = vmatpush2.msra.mxu0 0.0
    %867 = vmatprep.subr.mxu0 0.0
    %868 = vmatpush2.msra.mxu0 0.0
    %869 = vmatprep.subr.mxu0 0.0
    %870 = vmatpush2.msra.mxu0 0.0
    %871 = vmatprep.subr.mxu0 0.0
    %872 = vmatpush2.msra.mxu0 0.0
    %873 = vmatprep.subr.mxu0 0.0
    %874 = vmatpush2.msra.mxu0 0.0
    %875 = vmatprep.subr.mxu0 0.0
    %876 = vmatpush2.msra.mxu0 0.0
    %877 = vmatprep.subr.mxu0 0.0
    %878 = vmatpush2.msra.mxu0 0.0
    %879 = vmatprep.subr.mxu0 0.0
    %880 = vmatpush2.msra.mxu0 0.0
    %881 = vmatprep.subr.mxu0 0.0
    %882 = vmatpush2.msra.mxu0 0.0
    %883 = vmatprep.mubr.f32.mxu0 0.0
    %884 = vmatmul.mubr.f32.gmra.mxu0 %v434
    %v885 = vpop.f32.mrf.mxu0
    %v886 = vadd.f32 %v816, %v885
    %v887 = vpop.f32.mrf.mxu0
    %888 = vdwg.mxu0
    %s889 = scalar_lea.vmem [#allocation7], 5
    %v890 = vld [vmem:[%s889] sm:$0x1]
    %v892 = vlaneseq
    %v893 = vshrl.u32 %v892, 7
    %v894 = vsub.s32 0, %v893
    %v895 = vrot.slane %v890, %v894
    %v897 = vadd.f32 %v886, %v895
    %898 = vst [vmem:[%s4] sm:$0xff] %v897
    // Predicated region
    $region34: #{lai_forward.1} parent=1 // pred_check
      _
    $region35: #{lai_forward.1} parent=1 // pred_check_branch
      %900 = sbr.rel (0) target = $region37
    $region36: #{lai_forward.1} parent=1 // pred_region
      _
    $region37: #{lai_forward.1} parent=1 // pred_fallthru
      _
    // Predicated region
    $region38: #{lai_forward.1} parent=1 // pred_check
      _
    $region39: #{lai_forward.1} parent=1 // pred_check_branch
      %902 = sbr.rel (0) target = $region41
    $region40: #{lai_forward.1} parent=1 // pred_region
      _
    $region41: #{lai_forward.1} parent=1 // pred_fallthru
      _
    %903 = vsyncpa [#allocation3], 1
    %904 = vsyncpa [#allocation5], 1
    %905 = vsyncpa [#allocation8], 1

</llo_original>
